<compile_context>
chip_gen: v7x
topology: tpu7x:2x2x1
jax: 0.10.0
libtpu: 0.0.40
codegen_flags: <defaults>
</compile_context>

<pallas_src>
import functools

import jax
import jax.numpy as jnp
from jax.experimental import pallas as pl
from jax.experimental.pallas import tpu as pltpu

_LANES = 128
_TARGET_BLOCK_ROWS = 2048     # 2048 * 128 * 4 B = 1 MiB per VMEM buffer
_MIN_PALLAS_ELEMS = 1024      # below this, kernel launch overhead dominates -> plain jnp


def _round_up(a, m):
    return ((a + m - 1) // m) * m


def nonlinear_kernel(params_ref, x_ref, o_ref, *, hidden):
    # params (SMEM, f32[3H+1]): [w1[0..H-1], b1[0..H-1], w2[0..H-1], b2]
    # y = b2 + sum_j w2[j] * sigmoid(w1[j]*x + b1[j])  -- pure VPU/EUP math, no MXU.
    x = x_ref[...]                                     # (block_rows, 128) f32
    acc0 = jnp.full_like(x, params_ref[3 * hidden])    # broadcast b2
    acc1 = jnp.zeros_like(x) if hidden > 1 else None
    # H is tiny (module default 2) and static -> full unroll.
    # TODO(synk): if hidden grows beyond ~32, switch to lax.fori_loop(unroll=4).
    for j in range(hidden):
        w1j = params_ref[j]
        b1j = params_ref[hidden + j]
        w2j = params_ref[2 * hidden + j]
        h = x * w1j + b1j
        # sigmoid(h) == 0.5*tanh(0.5*h) + 0.5 : a single EUP transcendental
        # (vs. exp + reciprocal), keeps v7x mem-bound instead of EUP-bound.
        s = 0.5 * jnp.tanh(0.5 * h) + 0.5
        contrib = w2j * s
        if acc1 is not None and (j % 2 == 1):
            acc1 = acc1 + contrib
        else:
            acc0 = acc0 + contrib
    o_ref[...] = acc0 if acc1 is None else acc0 + acc1


def _jnp_forward_flat(x_flat, w1, b1, w2, b2):
    """Plain-jnp path for tiny inputs and the <128-element tail."""
    h = jax.nn.sigmoid(x_flat[:, None] * w1.reshape(1, -1) + b1.reshape(1, -1))
    return h @ w2.reshape(-1) + b2[0]


def nonlinear_forward(x, w1, b1, w2, b2):
    """Pallas implementation of Nonlinear.forward.

    x : (N, 1) float32; w1: (1, H); b1: (H,); w2: (H, 1); b2: (1,)
    returns (N,) float32 (torch's .squeeze() for N > 1).
    """
    n = x.shape[0]
    hidden = w1.shape[1]
    x_flat = x.reshape(-1).astype(jnp.float32)

    # Tiny N: pure launch/setup overhead territory -> skip the kernel entirely.
    if n < _MIN_PALLAS_ELEMS:
        return _jnp_forward_flat(x_flat, w1, b1, w2, b2)

    # --- lane-dense prefix: free reshape, no pad, no copy ---
    n_main = (n // _LANES) * _LANES
    rows = n_main // _LANES                        # >= 8 given the threshold above
    x2d = x_flat[:n_main].reshape(rows, _LANES)    # identity slice when n % 128 == 0

    # Block sizing: ~1 MiB buffers; at least 2 grid steps when rows allow it
    # (so v7x's second TensorCore gets work); sublane (8) aligned.  A partial
    # last block (rows % block_rows != 0) is masked by Pallas at the boundary.
    half = _round_up((rows + 1) // 2, 8)
    block_rows = max(8, min(_TARGET_BLOCK_ROWS, half))
    grid = ((rows + block_rows - 1) // block_rows,)

    # All parameters packed into one small SMEM vector (copied once, not a
    # per-grid-step pipelined input stream).
    params = jnp.concatenate(
        [w1.reshape(-1), b1.reshape(-1), w2.reshape(-1), b2.reshape(-1)]
    ).astype(jnp.float32)

    out2d = pl.pallas_call(
        functools.partial(nonlinear_kernel, hidden=hidden),
        out_shape=jax.ShapeDtypeStruct((rows, _LANES), jnp.float32),
        grid=grid,
        in_specs=[
            pl.BlockSpec(memory_space=pltpu.MemorySpace.SMEM),      # params
            pl.BlockSpec((block_rows, _LANES), lambda i: (i, 0)),   # x tiles
        ],
        out_specs=pl.BlockSpec((block_rows, _LANES), lambda i: (i, 0)),
        compiler_params=pltpu.CompilerParams(
            dimension_semantics=("parallel",)),
        cost_estimate=pl.CostEstimate(
            flops=8 * hidden * n_main,
            transcendentals=hidden * n_main,
            bytes_accessed=2 * 4 * n_main),
    )(params, x2d)

    out_main = out2d.reshape(-1)                   # free row-major reshape
    if n_main == n:
        return out_main

    # <128-element ragged tail: negligible plain-jnp work, then one concat.
    tail = _jnp_forward_flat(x_flat[n_main:], w1, b1, w2, b2)
    return jnp.concatenate([out_main, tail])


def reference_forward(x, w1, b1, w2, b2):
    h = jax.nn.sigmoid(x @ w1 + b1)
    return (h @ w2 + b2).squeeze()


if __name__ == "__main__":
    hidden_size = 2

    key = jax.random.PRNGKey(0)
    kx, kw1, kb1, kw2, kb2 = jax.random.split(key, 5)

    # Deterministic "randn"-style parameter init (same shapes as the module).
    w1 = jax.random.normal(kw1, (1, hidden_size), dtype=jnp.float32)
    b1 = jax.random.normal(kb1, (hidden_size,), dtype=jnp.float32)
    w2 = jax.random.normal(kw2, (hidden_size, 1), dtype=jnp.float32)
    b2 = jax.random.normal(kb2, (1,), dtype=jnp.float32)

    # 1) Toy case (module's typical use): tiny-N fast path (no kernel launch).
    x_small = jax.random.normal(kx, (8, 1), dtype=jnp.float32)
    y_small = jax.block_until_ready(nonlinear_forward(x_small, w1, b1, w2, b2))
    assert y_small.shape == (8,)
    assert jnp.allclose(y_small, reference_forward(x_small, w1, b1, w2, b2),
                        atol=1e-5, rtol=1e-5)

    # 2) Lane-exact case: N multiple of 128 -> pure Pallas path, grid of 2 steps,
    #    no pad / no slice / no concat anywhere.
    x_a = jax.random.normal(kx, (4096, 1), dtype=jnp.float32)
    y_a = jax.block_until_ready(nonlinear_forward(x_a, w1, b1, w2, b2))
    assert y_a.shape == (4096,)
    assert jnp.allclose(y_a, reference_forward(x_a, w1, b1, w2, b2),
                        atol=1e-5, rtol=1e-5)

    # 3) Ragged case: Pallas prefix with a partial (masked) last block plus a
    #    <128-element jnp tail.
    x_b = jax.random.normal(kx, (5000, 1), dtype=jnp.float32)
    y_b = jax.block_until_ready(nonlinear_forward(x_b, w1, b1, w2, b2))
    assert y_b.shape == (5000,)
    assert jnp.allclose(y_b, reference_forward(x_b, w1, b1, w2, b2),
                        atol=1e-5, rtol=1e-5)

    print("KERNEL_OK")
</pallas_src>

<mosaic_0001>
module attributes {stable_mosaic.version = 11 : i64} {
  func.func @nonlinear_kernel(%arg0: i32, %arg1: memref<7xf32, #tpu.memory_space<smem>>, %arg2: memref<16x128xf32, #tpu.memory_space<vmem>>, %arg3: memref<16x128xf32, #tpu.memory_space<vmem>>) attributes {dimension_semantics = [#tpu.dimension_semantics<parallel>], iteration_bounds = array<i64: 2>, scalar_prefetch = 0 : i64, scratch_operands = 0 : i64, tpu.core_type = #tpu.core_type<tc>, window_params = [{transform_indices = @transform_0, window_bounds = array<i64: 7>}, {transform_indices = @transform_1, window_bounds = array<i64: 16, 128>}, {transform_indices = @transform_2, window_bounds = array<i64: 16, 128>}]} {
    %c0 = arith.constant 0 : index
    %c0_0 = arith.constant 0 : index
    %0 = vector.load %arg2[%c0, %c0_0] : memref<16x128xf32, #tpu.memory_space<vmem>>, vector<16x128xf32>
    %c6 = arith.constant 6 : index
    %1 = memref.load %arg1[%c6] : memref<7xf32, #tpu.memory_space<smem>>
    %2 = vector.broadcast %1 : f32 to vector<16x128xf32>
    %cst = arith.constant 0.000000e+00 : f32
    %3 = vector.broadcast %cst : f32 to vector<16x128xf32>
    %c0_1 = arith.constant 0 : index
    %4 = memref.load %arg1[%c0_1] : memref<7xf32, #tpu.memory_space<smem>>
    %c2 = arith.constant 2 : index
    %5 = memref.load %arg1[%c2] : memref<7xf32, #tpu.memory_space<smem>>
    %c4 = arith.constant 4 : index
    %6 = memref.load %arg1[%c4] : memref<7xf32, #tpu.memory_space<smem>>
    %7 = vector.broadcast %4 : f32 to vector<16x128xf32>
    %8 = arith.mulf %0, %7 : vector<16x128xf32>
    %9 = vector.broadcast %5 : f32 to vector<16x128xf32>
    %10 = arith.addf %8, %9 : vector<16x128xf32>
    %cst_2 = arith.constant 5.000000e-01 : f32
    %11 = vector.broadcast %cst_2 : f32 to vector<16x128xf32>
    %12 = arith.mulf %11, %10 : vector<16x128xf32>
    %13 = math.tanh %12 : vector<16x128xf32>
    %cst_3 = arith.constant 5.000000e-01 : f32
    %14 = vector.broadcast %cst_3 : f32 to vector<16x128xf32>
    %15 = arith.mulf %14, %13 : vector<16x128xf32>
    %cst_4 = arith.constant 5.000000e-01 : f32
    %16 = vector.broadcast %cst_4 : f32 to vector<16x128xf32>
    %17 = arith.addf %15, %16 : vector<16x128xf32>
    %18 = vector.broadcast %6 : f32 to vector<16x128xf32>
    %19 = arith.mulf %18, %17 : vector<16x128xf32>
    %20 = arith.addf %2, %19 : vector<16x128xf32>
    %c1 = arith.constant 1 : index
    %21 = memref.load %arg1[%c1] : memref<7xf32, #tpu.memory_space<smem>>
    %c3 = arith.constant 3 : index
    %22 = memref.load %arg1[%c3] : memref<7xf32, #tpu.memory_space<smem>>
    %c5 = arith.constant 5 : index
    %23 = memref.load %arg1[%c5] : memref<7xf32, #tpu.memory_space<smem>>
    %24 = vector.broadcast %21 : f32 to vector<16x128xf32>
    %25 = arith.mulf %0, %24 : vector<16x128xf32>
    %26 = vector.broadcast %22 : f32 to vector<16x128xf32>
    %27 = arith.addf %25, %26 : vector<16x128xf32>
    %cst_5 = arith.constant 5.000000e-01 : f32
    %28 = vector.broadcast %cst_5 : f32 to vector<16x128xf32>
    %29 = arith.mulf %28, %27 : vector<16x128xf32>
    %30 = math.tanh %29 : vector<16x128xf32>
    %cst_6 = arith.constant 5.000000e-01 : f32
    %31 = vector.broadcast %cst_6 : f32 to vector<16x128xf32>
    %32 = arith.mulf %31, %30 : vector<16x128xf32>
    %cst_7 = arith.constant 5.000000e-01 : f32
    %33 = vector.broadcast %cst_7 : f32 to vector<16x128xf32>
    %34 = arith.addf %32, %33 : vector<16x128xf32>
    %35 = vector.broadcast %23 : f32 to vector<16x128xf32>
    %36 = arith.mulf %35, %34 : vector<16x128xf32>
    %37 = arith.addf %3, %36 : vector<16x128xf32>
    %38 = arith.addf %20, %37 : vector<16x128xf32>
    %c0_8 = arith.constant 0 : index
    %c0_9 = arith.constant 0 : index
    %39 = vector.load %arg3[%c0_8, %c0_9] : memref<16x128xf32, #tpu.memory_space<vmem>>, vector<16x128xf32>
    tpu.vector_store %arg3[%c0_8, %c0_9], %38 {strides = array<i32>} : memref<16x128xf32, #tpu.memory_space<vmem>>, vector<16x128xf32>,
    return
  }
  func.func @transform_0(%arg0: i32) -> i32 {
    %c0_i32 = arith.constant 0 : i32
    %c0_i32_0 = arith.constant 0 : i32
    return %c0_i32 : i32
  }
  func.func @transform_1(%arg0: i32) -> (i32, i32) {
    %c0_i32 = arith.constant 0 : i32
    %c0_i32_0 = arith.constant 0 : i32
    return %arg0, %c0_i32 : i32, i32
  }
  func.func @transform_2(%arg0: i32) -> (i32, i32) {
    %c0_i32 = arith.constant 0 : i32
    %c0_i32_0 = arith.constant 0 : i32
    return %arg0, %c0_i32 : i32, i32
  }
}

</mosaic_0001>

<llo_original>
// kernel: tpu_custom_call.1
$region0: #{tpu_custom_call.1}
  #allocation0 [shape = 'u32[]', space=smem, size = 0x4, offset = 0x4, fixed_abs, tag = 'smem constant byte address 0x4 - core index']
  #allocation1 [shape = 'u32[144,128]{1,0:T(1,128)}', space=vmem, size = 0x12000, scoped, tag = 'internal scratch']
  %s0 = inlined_call_operand.hbm [shape: f32[7], index: 0, kind: input, shape index: {}]
  %s1 = inlined_call_operand.hbm [shape: f32[32,128], index: 1, kind: input, shape index: {}]
  %s2 = inlined_call_operand.hbm [shape: f32[32,128], index: 2, kind: output, shape index: {}]
  %s3 = sld [smem:[#allocation0]]
  $region49: #{tpu_custom_call.1} parent=0
    _
  %s5 = ssub.s32 1, %s3
  %s6 = scalar_select 0, %s5, %s3
  $region1: #{tpu_custom_call.1} parent=0
    #allocation2 [shape = 'u8[512]{0}', space=smem, size = 0x200, scoped, tag = 'input window, operand 0, single buffered']
    #allocation3 [shape = 's32[2]{0}', space=sflag, size = 0x8, scoped, tag = 'scoped memory for tpu_custom_call.1']
    #allocation4 [shape = 's32[2]{0}', space=sflag, size = 0x8, scoped, tag = 'scoped memory for tpu_custom_call.1']
    #allocation5 [shape = 's32[2]{0}', space=sflag, size = 0x8, scoped, tag = 'scoped memory for tpu_custom_call.1']
    #allocation6 [shape = 'u8[16384]{0}', space=vmem, size = 0x4000, scoped, tag = 'input window, operand 1']
    #allocation7 [shape = 'u8[16384]{0}', space=vmem, size = 0x4000, scoped, tag = 'output window, operand 0']
    %7 = vsyncpa [#allocation5], 0
    %8 = vsyncpa [#allocation3], 0
    %s9 = scalar_lea.sflag [#allocation3], 1
    %10 = vsyncpa %s9, 0
    %11 = vsyncpa [#allocation4], 0
    %s12 = scalar_lea.sflag [#allocation4], 1
    %13 = vsyncpa %s12, 0
    loop: start=0, step=1, limit=4
    $region2: #{tpu_custom_call.1} parent=1 // loop_pre_header
      _
    $region3: #{tpu_custom_call.1} parent=1 // loop_header
      %s15 = sphi 0, %s19
      %p16 = scmp.ge.s32.totalorder %s15, 4
      %s23 = sphi 0, %s23
      %s25 = sphi 0, %s23
      %s26 = sphi 0, %s25
      %s40 = sphi 0, %s26
      %s46 = sphi 0, %s48
      %s49 = sphi 0, %s46
      %s50 = sphi 0, %s49
      %s66 = sphi 0, %s50
      %s72 = sphi 0, %s74
      %s75 = sphi 0, %s72
      %s76 = sphi 0, %s75
      %s92 = sphi 0, %s76
    $region4: #{tpu_custom_call.1} parent=1 // loop_header_branch
      %18 = sbr.rel (%p16) target = $region8
    $region5: #{tpu_custom_call.1} parent=1 // loop_body
      %s20 = ssub.s32 %s15, 1
      %s21 = ssub.s32 %s15, 2
      %s22 = sadd.s32 %s15, 1
      %s24 = sadd.s32 %s23, 1
      %p27 = scmp.eq.s32.totalorder %s15, 1
      %p28 = scmp.ne.s32.totalorder %s23, %s25
      %p29 = scmp.eq.s32.totalorder %s15, 0
      %p30 = por %p28, %p29
      %p31 = scmp.ne.s32.totalorder %s23, %s25
      %p32 = scmp.eq.s32.totalorder %s20, 1
      %p33 = por %p31, %p32
      %p34 = scmp.ne.s32.totalorder %s25, %s26
      %p35 = scmp.eq.s32.totalorder %s20, 0
      %p36 = por %p34, %p35
      %p37 = scmp.ne.s32.totalorder %s25, %s26
      %p38 = scmp.eq.s32.totalorder %s21, 1
      %p39 = por %p37, %p38
      %p41 = scmp.ne.s32.totalorder %s26, %s40
      %p42 = scmp.eq.s32.totalorder %s21, 0
      %p43 = por %p41, %p42
      %s44 = ssub.s32 %s15, %s22
      %p45 = scmp.eq.s32.totalorder %s44, 0
      %s47 = sadd.s32 %s46, 1
      %s48 = scalar_select %p45, %s46, %s47
      %p51 = pneg %p45
      %p52 = scmp.eq.s32.totalorder %s15, 1
      %p53 = por %p51, %p52
      %p54 = scmp.ne.s32.totalorder %s46, %s49
      %p55 = scmp.eq.s32.totalorder %s15, 0
      %p56 = por %p54, %p55
      %p57 = scmp.ne.s32.totalorder %s46, %s49
      %p58 = scmp.eq.s32.totalorder %s20, 1
      %p59 = por %p57, %p58
      %p60 = scmp.ne.s32.totalorder %s49, %s50
      %p61 = scmp.eq.s32.totalorder %s20, 0
      %p62 = por %p60, %p61
      %p63 = scmp.ne.s32.totalorder %s49, %s50
      %p64 = scmp.eq.s32.totalorder %s21, 1
      %p65 = por %p63, %p64
      %p67 = scmp.ne.s32.totalorder %s50, %s66
      %p68 = scmp.eq.s32.totalorder %s21, 0
      %p69 = por %p67, %p68
      %s70 = ssub.s32 %s15, %s22
      %p71 = scmp.eq.s32.totalorder %s70, 0
      %s73 = sadd.s32 %s72, 1
      %s74 = scalar_select %p71, %s72, %s73
      %p77 = pneg %p71
      %p78 = scmp.eq.s32.totalorder %s15, 1
      %p79 = por %p77, %p78
      %p80 = scmp.ne.s32.totalorder %s72, %s75
      %p81 = scmp.eq.s32.totalorder %s15, 0
      %p82 = por %p80, %p81
      %p83 = scmp.ne.s32.totalorder %s72, %s75
      %p84 = scmp.eq.s32.totalorder %s20, 1
      %p85 = por %p83, %p84
      %p86 = scmp.ne.s32.totalorder %s75, %s76
      %p87 = scmp.eq.s32.totalorder %s20, 0
      %p88 = por %p86, %p87
      %p89 = scmp.ne.s32.totalorder %s75, %s76
      %p90 = scmp.eq.s32.totalorder %s21, 1
      %p91 = por %p89, %p90
      %p93 = scmp.ne.s32.totalorder %s76, %s92
      %p94 = scmp.eq.s32.totalorder %s21, 0
      %p95 = por %p93, %p94
      %p96 = scmp.le.s32.totalorder 1, %s15
      %p97 = scmp.lt.s32.totalorder %s15, 3
      %p98 = pnand %p96, %p97
      %p99 = pneg %p98
      // Predicated region
      $region9: #{tpu_custom_call.1} parent=5 // pred_check
        _
      $region10: #{tpu_custom_call.1} parent=5 // pred_check_branch
        %101 = sbr.rel (%p98) target = $region12
      $region11: #{tpu_custom_call.1} parent=5 // pred_region
        %s102 = ssub.s32 %s15, 1
        // Predicated region
        $region13: #{tpu_custom_call.1} parent=11 // pred_check
          %p103 = pneg %p36
        $region14: #{tpu_custom_call.1} parent=11 // pred_check_branch
          %105 = sbr.rel (%p103) target = $region16
        $region15: #{tpu_custom_call.1} parent=11 // pred_region
          %s107 = ssub.s32 16, 16
          %108 = vsyncadd [#allocation5], %s107
          %111 = dma.hbm_to_smem %s0, 16, [#allocation2], [#allocation5]
        $region16: #{tpu_custom_call.1} parent=11 // pred_fallthru
          _
      $region12: #{tpu_custom_call.1} parent=5 // pred_fallthru
        _
      %p112 = scmp.lt.s32.totalorder %s15, 2
      // Predicated region
      $region17: #{tpu_custom_call.1} parent=5 // pred_check
        %p113 = pneg %p112
      $region18: #{tpu_custom_call.1} parent=5 // pred_check_branch
        %115 = sbr.rel (%p113) target = $region20
      $region19: #{tpu_custom_call.1} parent=5 // pred_region
        // Predicated region
        $region21: #{tpu_custom_call.1} parent=19 // pred_check
          %p116 = pneg %p56
        $region22: #{tpu_custom_call.1} parent=19 // pred_check_branch
          %118 = sbr.rel (%p116) target = $region24
        $region23: #{tpu_custom_call.1} parent=19 // pred_region
          %s119 = sand.u32 %s46, 1
          %s120 = scalar_lea.sflag [#allocation3], %s119
          %s121 = sand.u32 %s46, 1
          %s122 = smul.addr %s121, 16
          %s123 = scalar_lea.vmem [#allocation6], %s122
          %s124 = smul.u32 2, %s15
          %s126 = ssub.s32 256, 256
          %127 = vsyncadd %s120, %s126
          %s128 = smul.addr %s124, 128
          %s129 = scalar_lea.hbm %s1, %s128
          %s130 = sshll.u32 %s123, 4
          %s131 = int_to_ptr.vmem [resolvable:$true] %s130
          %136 = dma.hbm_to_vmem [thread:$0]  %s129, 256, %s131, %s120, 128, 128, 8
        $region24: #{tpu_custom_call.1} parent=19 // pred_fallthru
          _
      $region20: #{tpu_custom_call.1} parent=5 // pred_fallthru
        _
      %p137 = scmp.le.s32.totalorder 1, %s15
      %p138 = scmp.lt.s32.totalorder %s15, 3
      %p139 = pnand %p137, %p138
      %p140 = pneg %p139
      // Predicated region
      $region25: #{tpu_custom_call.1} parent=5 // pred_check
        _
      $region26: #{tpu_custom_call.1} parent=5 // pred_check_branch
        %142 = sbr.rel (%p139) target = $region28
      $region27: #{tpu_custom_call.1} parent=5 // pred_region
        %s143 = ssub.s32 %s15, 1
        // Predicated region
        $region29: #{tpu_custom_call.1} parent=27 // pred_check
          %p144 = pneg %p36
        $region30: #{tpu_custom_call.1} parent=27 // pred_check_branch
          %146 = sbr.rel (%p144) target = $region32
        $region31: #{tpu_custom_call.1} parent=27 // pred_region
          %147 = dma.done [#allocation5], 16
        $region32: #{tpu_custom_call.1} parent=27 // pred_fallthru
          _
        %s148 = sand.u32 %s49, 1
        %s149 = scalar_lea.sflag [#allocation3], %s148
        %s150 = sand.u32 %s49, 1
        %s151 = smul.addr %s150, 16
        %s152 = scalar_lea.vmem [#allocation6], %s151
        // Predicated region
        $region33: #{tpu_custom_call.1} parent=27 // pred_check
          %p153 = pneg %p62
        $region34: #{tpu_custom_call.1} parent=27 // pred_check_branch
          %155 = sbr.rel (%p153) target = $region36
        $region35: #{tpu_custom_call.1} parent=27 // pred_region
          %156 = dma.done %s149, 256
        $region36: #{tpu_custom_call.1} parent=27 // pred_fallthru
          _
        %157 = sfence
        %p158 = pneg %p36
        %p159 = pneg %p33
        %s160 = sand.u32 %s49, 1
        %s161 = scalar_lea.sflag [#allocation3], %s160
        %s162 = sand.u32 %s49, 1
        %s163 = smul.addr %s162, 16
        %s164 = scalar_lea.vmem [#allocation6], %s163
        %p165 = pneg %p62
        %p166 = pneg %p59
        %p167 = pneg %p88
        %p168 = pneg %p85
        %s169 = sand.u32 %s75, 1
        %s170 = scalar_lea.sflag [#allocation4], %s169
        %s171 = sand.u32 %s75, 1
        %s172 = smul.addr %s171, 16
        %s173 = scalar_lea.vmem [#allocation7], %s172
        %s174 = smul.u32 2, %s20
        %s175 = smul.u32 2, %s20
        %v176 = vld [vmem:[%s152] sm:$0xff]
        %v177 = vld [vmem:[%s152 + $0x8] sm:$0xff]
        %s178 = sld [smem:[#allocation2 + $0x6]]
        %v179 = vstv %s178
        %s180 = sld [smem:[#allocation2]]
        %s181 = sld [smem:[#allocation2 + $0x2]]
        %s182 = sld [smem:[#allocation2 + $0x4]]
        %v183 = vstv %s180
        %v184 = vmul.f32 %v176, %v183
        %v185 = vmul.f32 %v177, %v183
        %v186 = vstv %s181
        %v187 = vadd.f32 %v184, %v186
        %v188 = vadd.f32 %v185, %v186
        %v189 = vmul.f32 %v187, 0.5
        %v190 = vmul.f32 %v188, 0.5
        %v191 = vtanh.pop %v189
        %v192 = vtanh.pop %v190
        %v193 = vmul.f32 %v191, 0.5
        %v194 = vmul.f32 %v192, 0.5
        %v195 = vadd.f32 %v193, 0.5
        %v196 = vadd.f32 %v194, 0.5
        %v197 = vstv %s182
        %v198 = vmul.f32 %v197, %v195
        %v199 = vmul.f32 %v197, %v196
        %v200 = vadd.f32 %v179, %v198
        %v201 = vadd.f32 %v179, %v199
        %s202 = sld [smem:[#allocation2 + $0x1]]
        %s203 = sld [smem:[#allocation2 + $0x3]]
        %s204 = sld [smem:[#allocation2 + $0x5]]
        %v205 = vstv %s202
        %v206 = vmul.f32 %v176, %v205
        %v207 = vmul.f32 %v177, %v205
        %v208 = vstv %s203
        %v209 = vadd.f32 %v206, %v208
        %v210 = vadd.f32 %v207, %v208
        %v211 = vmul.f32 %v209, 0.5
        %v212 = vmul.f32 %v210, 0.5
        %v213 = vtanh.pop %v211
        %v214 = vtanh.pop %v212
        %v215 = vmul.f32 %v213, 0.5
        %v216 = vmul.f32 %v214, 0.5
        %v217 = vadd.f32 %v215, 0.5
        %v218 = vadd.f32 %v216, 0.5
        %v219 = vstv %s204
        %v220 = vmul.f32 %v219, %v217
        %v221 = vmul.f32 %v219, %v218
        %v222 = vadd.f32 %v220, 0.0
        %v223 = vadd.f32 %v221, 0.0
        %v224 = vadd.f32 %v200, %v222
        %v225 = vadd.f32 %v201, %v223
        %226 = vst [vmem:[%s173] sm:$0xff] %v224
        %227 = vst [vmem:[%s173 + $0x8] sm:$0xff] %v225
        %s228 = sand.u32 %s75, 1
        %s229 = scalar_lea.sflag [#allocation4], %s228
        %s230 = sand.u32 %s75, 1
        %s231 = smul.addr %s230, 16
        %s232 = scalar_lea.vmem [#allocation7], %s231
        // Predicated region
        $region37: #{tpu_custom_call.1} parent=27 // pred_check
          %p233 = pneg %p85
        $region38: #{tpu_custom_call.1} parent=27 // pred_check_branch
          %235 = sbr.rel (%p233) target = $region40
        $region39: #{tpu_custom_call.1} parent=27 // pred_region
          %s236 = smul.u32 2, %s20
          %s238 = ssub.s32 256, 256
          %239 = vsyncadd %s229, %s238
          %s240 = smul.addr %s236, 128
          %s241 = scalar_lea.hbm %s2, %s240
          %s242 = sshll.u32 %s232, 4
          %s243 = int_to_ptr.vmem [resolvable:$true] %s242
          %248 = dma.vmem_to_hbm [thread:$0]  %s243, 256, %s241, %s229, 128, 128, 8
        $region40: #{tpu_custom_call.1} parent=27 // pred_fallthru
          _
      $region28: #{tpu_custom_call.1} parent=5 // pred_fallthru
        _
      %p249 = scmp.le.s32.totalorder 2, %s15
      // Predicated region
      $region41: #{tpu_custom_call.1} parent=5 // pred_check
        %p250 = pneg %p249
      $region42: #{tpu_custom_call.1} parent=5 // pred_check_branch
        %252 = sbr.rel (%p250) target = $region44
      $region43: #{tpu_custom_call.1} parent=5 // pred_region
        %s253 = ssub.s32 %s15, 2
        // Predicated region
        $region45: #{tpu_custom_call.1} parent=43 // pred_check
          %p254 = pneg %p91
        $region46: #{tpu_custom_call.1} parent=43 // pred_check_branch
          %256 = sbr.rel (%p254) target = $region48
        $region47: #{tpu_custom_call.1} parent=43 // pred_region
          %s257 = sand.u32 %s76, 1
          %s258 = scalar_lea.sflag [#allocation4], %s257
          %s259 = sand.u32 %s76, 1
          %s260 = smul.addr %s259, 16
          %s261 = scalar_lea.vmem [#allocation7], %s260
          %262 = dma.done %s258, 256
        $region48: #{tpu_custom_call.1} parent=43 // pred_fallthru
          _
      $region44: #{tpu_custom_call.1} parent=5 // pred_fallthru
        _
    $region6: #{tpu_custom_call.1} parent=1 // loop_footer
      %s19 = sadd.s32 1, %s15
    $region7: #{tpu_custom_call.1} parent=1 // loop_footer_branch
      %14 = sbr.rel target = $region3
    $region8: #{tpu_custom_call.1} parent=1 // loop_exit
      _
    %263 = vsyncpa [#allocation3], 1
    %s264 = scalar_lea.sflag [#allocation3], 1
    %265 = vsyncpa %s264, 1
    %266 = vsyncpa [#allocation4], 1
    %s267 = scalar_lea.sflag [#allocation4], 1
    %268 = vsyncpa %s267, 1
    %269 = vsyncpa [#allocation5], 1
    %s270 = scalar_lea.sflag [#allocation5], 1
    %271 = vsyncpa %s270, 1

</llo_original>
